<compile_context>
chip_gen: v6e
topology: v6e:2x2x1
jax: 0.10.0
libtpu: 0.0.40
codegen_flags: <defaults>
</compile_context>

<pallas_src>
import functools

import jax
import jax.numpy as jnp
from jax.experimental import pallas as pl
from jax.experimental.pallas import tpu as pltpu

# Explicit scoped-VMEM limit: above the 16/32 MiB defaults, below v7x's 64 MiB
# physical capacity (leaves headroom for internal scratch).
_VMEM_LIMIT_BYTES = 48 * 1024 * 1024


def _pick_tile_h(H, W, C, itemsize=4, target_bytes=2 << 20):
    """Largest divisor of H whose f32 row tile stays within ~target_bytes,
    preferring >= 2 row tiles (pipelining + a second parallel grid axis)."""
    divisors = [d for d in range(1, H + 1) if H % d == 0]
    fitting = [d for d in divisors if d * W * C * itemsize <= target_bytes] or [1]
    th = max(fitting)
    if th == H and H >= 8:
        proper = [d for d in fitting if d < H]
        if proper:
            th = max(proper)
    return th


# -----------------------------------------------------------------------------
# Kernel 1: per-channel [sum, sum^2] of x, single pass, accumulated over row
# tiles.  The tiny group-fold / rsqrt finalize happens in plain JAX outside.
# -----------------------------------------------------------------------------
def _gn_stats_kernel(x_ref, st_ref):
    r = pl.program_id(1)
    x = x_ref[0].astype(jnp.float32)                       # (TH, W, C)
    th, w, c = x.shape
    x2 = x.reshape(th * w, c)
    partial = jnp.concatenate(
        [jnp.sum(x2, axis=0, keepdims=True),
         jnp.sum(x2 * x2, axis=0, keepdims=True)], axis=0)  # (2, C)

    @pl.when(r == 0)
    def _init():
        st_ref[0] = partial

    @pl.when(r != 0)
    def _acc():
        st_ref[0] += partial


def _gn_stats(x_nhwc, tile_h):
    N, H, W, C = x_nhwc.shape
    rt = H // tile_h
    return pl.pallas_call(
        _gn_stats_kernel,
        out_shape=jax.ShapeDtypeStruct((N, 2, C), jnp.float32),
        grid=(N, rt),
        in_specs=[pl.BlockSpec((1, tile_h, W, C), lambda n, r: (n, r, 0, 0))],
        out_specs=pl.BlockSpec((1, 2, C), lambda n, r: (n, 0, 0)),
        compiler_params=pltpu.CompilerParams(
            dimension_semantics=("parallel", "arbitrary"),
            vmem_limit_bytes=_VMEM_LIMIT_BYTES),
    )(x_nhwc)


def _gn_scale_shift(stats, gamma, beta, num_groups, count, eps):
    """Tiny (N, C) finalize in plain JAX: fold per-channel sums into per-group
    mean/rstd and pre-fold the GN affine into a per-channel scale/shift, so the
    hot kernels never do cross-lane group reshuffles."""
    N, _, C = stats.shape
    cg = C // num_groups
    s = stats[:, 0, :].reshape(N, num_groups, cg).sum(-1)
    ss = stats[:, 1, :].reshape(N, num_groups, cg).sum(-1)
    mean = s / count
    var = jnp.maximum(ss / count - mean * mean, 0.0)
    rstd = jax.lax.rsqrt(var + eps)
    rstd_c = jnp.repeat(rstd, cg, axis=-1)                  # (N, C)
    mean_c = jnp.repeat(mean, cg, axis=-1)
    scale = rstd_c * gamma[None, :]
    shift = beta[None, :] - mean_c * scale
    return scale.reshape(N, 1, C).astype(jnp.float32), \
           shift.reshape(N, 1, C).astype(jnp.float32)


# -----------------------------------------------------------------------------
# Kernel 2: fused GroupNorm(scale/shift) -> swish -> 3x3 conv, row-tiled with
# 1-row halos, optional residual add and optional stats of the conv output.
# -----------------------------------------------------------------------------
def _gn_swish_conv_kernel(xc_ref, xt_ref, xb_ref, sc_ref, sh_ref, w_ref, b_ref,
                          *rest, compute_dtype, with_stats, with_residual):
    idx = 0
    res_ref = None
    if with_residual:
        res_ref = rest[idx]
        idx += 1
    o_ref = rest[idx]
    idx += 1
    st_ref = rest[idx] if with_stats else None
    xs_ref = rest[-1]                                       # VMEM padded scratch

    r = pl.program_id(1)
    last_r = pl.num_programs(1) - 1
    th = xc_ref.shape[1]
    w = xc_ref.shape[2]
    c = xc_ref.shape[3]
    cout = o_ref.shape[3]

    scale = sc_ref[0].astype(jnp.float32)                   # (1, C)
    shift = sh_ref[0].astype(jnp.float32)                   # (1, C)

    def norm_swish(v):                                      # v: (rows, W, C) f32
        y = v * scale + shift
        # swish; sigmoid via tanh keeps the transcendental on the EUP
        # (avoids the VALU divide flagged in the perf review).
        return y * (0.5 * (jnp.tanh(0.5 * y) + 1.0))

    # Assemble the zero-padded, normalized+activated tile in VMEM scratch
    # (replaces the previous wrapper-side jnp.pad HBM round trip).
    xs_ref[1:th + 1, 1:w + 1, :] = norm_swish(xc_ref[0].astype(jnp.float32))
    top = norm_swish(xt_ref[0].astype(jnp.float32))         # (1, W, C)
    xs_ref[0:1, 1:w + 1, :] = jnp.where(r == 0, jnp.zeros_like(top), top)
    bot = norm_swish(xb_ref[0].astype(jnp.float32))
    xs_ref[th + 1:th + 2, 1:w + 1, :] = jnp.where(r == last_r,
                                                  jnp.zeros_like(bot), bot)
    zcol = jnp.zeros((th + 2, 1, c), xs_ref.dtype)
    xs_ref[:, 0:1, :] = zcol
    xs_ref[:, w + 1:w + 2, :] = zcol

    # 3x3 conv as 3 MXU matmuls: kw taps folded into the contraction (K = 3*C).
    # Operands cast to bf16 (compute_dtype); accumulation stays in f32.
    acc = jnp.zeros((th * w, cout), jnp.float32)
    for dy in range(3):
        slab = xs_ref[dy:dy + th, :, :]                     # (TH, W+2, C)
        patch = jnp.concatenate(
            [slab[:, 0:w, :].astype(compute_dtype),
             slab[:, 1:w + 1, :].astype(compute_dtype),
             slab[:, 2:w + 2, :].astype(compute_dtype)], axis=-1)
        acc = acc + jnp.dot(patch.reshape(th * w, 3 * c), w_ref[dy],
                            preferred_element_type=jnp.float32)
    h = acc + b_ref[0].astype(jnp.float32)                  # (TH*W, Cout)

    if with_stats:
        # Single-pass raw stats of the conv output for the *next* GroupNorm,
        # accumulated across row tiles (so h1 never has to be re-read for stats).
        partial = jnp.concatenate(
            [jnp.sum(h, axis=0, keepdims=True),
             jnp.sum(h * h, axis=0, keepdims=True)], axis=0)  # (2, Cout)

        @pl.when(r == 0)
        def _init():
            st_ref[0] = partial

        @pl.when(r != 0)
        def _acc():
            st_ref[0] += partial

    out = h.reshape(th, w, cout)
    if with_residual:
        out = out + res_ref[0].astype(jnp.float32)
    o_ref[0] = out.astype(o_ref.dtype)


def _gn_swish_conv(x_nhwc, scale, shift, w_k3, b, *, tile_h, compute_dtype,
                   residual=None, collect_stats=False, out_dtype=None):
    N, H, W, C = x_nhwc.shape
    cout = w_k3.shape[-1]
    rt = H // tile_h
    out_dtype = x_nhwc.dtype if out_dtype is None else out_dtype

    in_specs = [
        # center rows of the tile
        pl.BlockSpec((1, tile_h, W, C), lambda n, r: (n, r, 0, 0)),
        # one-row top / bottom halos (clamped index; zeroed in-kernel at edges)
        pl.BlockSpec((1, 1, W, C),
                     lambda n, r: (n, jnp.maximum(r * tile_h - 1, 0), 0, 0)),
        pl.BlockSpec((1, 1, W, C),
                     lambda n, r: (n, jnp.minimum(r * tile_h + tile_h, H - 1), 0, 0)),
        pl.BlockSpec((1, 1, C), lambda n, r: (n, 0, 0)),          # GN scale
        pl.BlockSpec((1, 1, C), lambda n, r: (n, 0, 0)),          # GN shift
        pl.BlockSpec((3, 3 * C, cout), lambda n, r: (0, 0, 0)),   # conv weights
        pl.BlockSpec((1, 1, cout), lambda n, r: (0, 0, 0)),       # conv bias
    ]
    args = [x_nhwc, x_nhwc, x_nhwc, scale, shift, w_k3, b]
    if residual is not None:
        # residual streamed as a normal (double-buffered) row tile
        in_specs.append(pl.BlockSpec((1, tile_h, W, cout),
                                     lambda n, r: (n, r, 0, 0)))
        args.append(residual)

    out_spec_main = pl.BlockSpec((1, tile_h, W, cout), lambda n, r: (n, r, 0, 0))
    if collect_stats:
        out_shape = (jax.ShapeDtypeStruct((N, H, W, cout), out_dtype),
                     jax.ShapeDtypeStruct((N, 2, cout), jnp.float32))
        out_specs = (out_spec_main,
                     pl.BlockSpec((1, 2, cout), lambda n, r: (n, 0, 0)))
        dims = ("parallel", "arbitrary")   # stats accumulate across row tiles
    else:
        out_shape = jax.ShapeDtypeStruct((N, H, W, cout), out_dtype)
        out_specs = out_spec_main
        dims = ("parallel", "parallel")

    kernel = functools.partial(_gn_swish_conv_kernel,
                               compute_dtype=compute_dtype,
                               with_stats=collect_stats,
                               with_residual=residual is not None)
    return pl.pallas_call(
        kernel,
        out_shape=out_shape,
        grid=(N, rt),
        in_specs=in_specs,
        out_specs=out_specs,
        scratch_shapes=[pltpu.VMEM((tile_h + 2, W + 2, C), jnp.float32)],
        compiler_params=pltpu.CompilerParams(
            dimension_semantics=dims, vmem_limit_bytes=_VMEM_LIMIT_BYTES),
    )(*args)


# -----------------------------------------------------------------------------
# ResnetBlock forward (module defaults: out_channels == in_channels, identity
# residual, no shortcut conv constructed).
# -----------------------------------------------------------------------------
def resnet_block_forward(x_nchw, params, *, in_channels, out_channels=None,
                         compute_dtype=jnp.bfloat16, eps=1e-6):
    out_channels = in_channels if out_channels is None else out_channels
    assert in_channels == out_channels, "default config builds no shortcut conv"
    num_groups = in_channels // 2

    x = jnp.transpose(x_nchw, (0, 2, 3, 1))                 # NCHW -> NHWC (glue)
    N, H, W, C = x.shape
    tile_h = _pick_tile_h(H, W, C)
    count = H * W * (C // num_groups)

    # conv weights HWIO -> (kh, kw*Cin, Cout); cast once to the MXU dtype.
    w1 = params["conv1_w"].reshape(3, 3 * C, out_channels).astype(compute_dtype)
    w2 = params["conv2_w"].reshape(3, 3 * out_channels,
                                   out_channels).astype(compute_dtype)
    b1 = params["conv1_b"].reshape(1, 1, out_channels).astype(jnp.float32)
    b2 = params["conv2_b"].reshape(1, 1, out_channels).astype(jnp.float32)

    # GN1 statistics (single pass over x) + tiny finalize.
    st1 = _gn_stats(x, tile_h)
    sc1, sh1 = _gn_scale_shift(st1, params["norm1_gamma"], params["norm1_beta"],
                               num_groups, count, eps)

    # Fused GN1 -> swish -> conv1 (emits GN2 raw stats as a by-product).
    h1, st2 = _gn_swish_conv(x, sc1, sh1, w1, b1, tile_h=tile_h,
                             compute_dtype=compute_dtype, collect_stats=True,
                             out_dtype=compute_dtype)
    sc2, sh2 = _gn_scale_shift(st2, params["norm2_gamma"], params["norm2_beta"],
                               num_groups, count, eps)

    # TODO(synk): nn.Dropout is identity at inference; training-mode dropout not implemented.
    # Fused GN2 -> swish -> conv2 -> + residual.
    out = _gn_swish_conv(h1, sc2, sh2, w2, b2, tile_h=tile_h,
                         compute_dtype=compute_dtype, residual=x,
                         out_dtype=x.dtype)
    return jnp.transpose(out, (0, 3, 1, 2))                 # NHWC -> NCHW


# -----------------------------------------------------------------------------
# Pure-JAX f32 reference (same math as the PyTorch module, eval mode).
# -----------------------------------------------------------------------------
def _ref_gn_swish(x, gamma, beta, groups, eps=1e-6):
    N, C, H, W = x.shape
    xg = x.reshape(N, groups, C // groups, H, W)
    mean = xg.mean(axis=(2, 3, 4), keepdims=True)
    var = ((xg - mean) ** 2).mean(axis=(2, 3, 4), keepdims=True)
    y = ((xg - mean) * jax.lax.rsqrt(var + eps)).reshape(N, C, H, W)
    y = y * gamma[None, :, None, None] + beta[None, :, None, None]
    return y * jax.nn.sigmoid(y)


def _ref_conv3x3(x, w_hwio, b):
    w_oihw = jnp.transpose(w_hwio, (3, 2, 0, 1))
    y = jax.lax.conv_general_dilated(
        x, w_oihw, window_strides=(1, 1), padding=((1, 1), (1, 1)),
        dimension_numbers=("NCHW", "OIHW", "NCHW"),
        precision=jax.lax.Precision.HIGHEST)
    return y + b[None, :, None, None]


def ref_forward(x, params, *, in_channels):
    g = in_channels // 2
    h = _ref_gn_swish(x, params["norm1_gamma"], params["norm1_beta"], g)
    h = _ref_conv3x3(h, params["conv1_w"], params["conv1_b"])
    h = _ref_gn_swish(h, params["norm2_gamma"], params["norm2_beta"], g)
    h = _ref_conv3x3(h, params["conv2_w"], params["conv2_b"])
    return x + h


# -----------------------------------------------------------------------------
if __name__ == "__main__":
    N, C, H, W = 2, 4, 16, 16          # in_channels = out_channels = 4
    key = jax.random.PRNGKey(0)
    keys = jax.random.split(key, 9)
    params = {
        "norm1_gamma": 1.0 + 0.1 * jax.random.normal(keys[0], (C,), jnp.float32),
        "norm1_beta": 0.1 * jax.random.normal(keys[1], (C,), jnp.float32),
        "conv1_w": 0.1 * jax.random.normal(keys[2], (3, 3, C, C), jnp.float32),
        "conv1_b": 0.1 * jax.random.normal(keys[3], (C,), jnp.float32),
        "norm2_gamma": 1.0 + 0.1 * jax.random.normal(keys[4], (C,), jnp.float32),
        "norm2_beta": 0.1 * jax.random.normal(keys[5], (C,), jnp.float32),
        "conv2_w": 0.1 * jax.random.normal(keys[6], (3, 3, C, C), jnp.float32),
        "conv2_b": 0.1 * jax.random.normal(keys[7], (C,), jnp.float32),
    }
    x = jax.random.normal(keys[8], (N, C, H, W), jnp.float32)

    out = resnet_block_forward(x, params, in_channels=C, out_channels=C)
    out = jax.block_until_ready(out)

    ref = jax.block_until_ready(ref_forward(x, params, in_channels=C))

    assert out.shape == (N, C, H, W) and out.dtype == jnp.float32
    max_err = float(jnp.max(jnp.abs(out - ref)))
    # Tolerance reflects bf16 MXU operands / bf16 intermediate vs the pure-f32
    # reference; structure bugs would produce errors orders of magnitude larger.
    assert jnp.allclose(out, ref, atol=5e-2, rtol=5e-2), f"max abs err = {max_err}"
    print("KERNEL_OK")
</pallas_src>

<mosaic_0001>
module attributes {stable_mosaic.version = 11 : i64} {
  func.func @_gn_stats_kernel(%arg0: i32, %arg1: i32, %arg2: memref<1x8x16x4xf32, #tpu.memory_space<vmem>>, %arg3: memref<1x2x4xf32, #tpu.memory_space<vmem>>) attributes {dimension_semantics = [#tpu.dimension_semantics<parallel>, #tpu.dimension_semantics<arbitrary>], iteration_bounds = array<i64: 2, 2>, scalar_prefetch = 0 : i64, scratch_operands = 0 : i64, tpu.core_type = #tpu.core_type<tc>, window_params = [{transform_indices = @transform_0, window_bounds = array<i64: 1, 8, 16, 4>}, {transform_indices = @transform_1, window_bounds = array<i64: 1, 2, 4>}]} {
    %c0 = arith.constant 0 : index
    %c0_0 = arith.constant 0 : index
    %c0_1 = arith.constant 0 : index
    %c0_2 = arith.constant 0 : index
    %0 = vector.load %arg2[%c0, %c0_0, %c0_1, %c0_2] : memref<1x8x16x4xf32, #tpu.memory_space<vmem>>, vector<1x8x16x4xf32>
    %1 = vector.shape_cast %0 : vector<1x8x16x4xf32> to vector<8x16x4xf32>
    %2 = vector.shape_cast %1 : vector<8x16x4xf32> to vector<128x4xf32>
    %cst = arith.constant dense<0.000000e+00> : vector<4xf32>
    %3 = vector.multi_reduction <add>, %2, %cst [0] : vector<128x4xf32> to vector<4xf32>
    %4 = vector.shape_cast %3 : vector<4xf32> to vector<1x4xf32>
    %5 = arith.mulf %2, %2 : vector<128x4xf32>
    %cst_3 = arith.constant dense<0.000000e+00> : vector<4xf32>
    %6 = vector.multi_reduction <add>, %5, %cst_3 [0] : vector<128x4xf32> to vector<4xf32>
    %7 = vector.shape_cast %6 : vector<4xf32> to vector<1x4xf32>
    %8 = tpu.concatenate %4, %7 in 0 : vector<1x4xf32>, vector<1x4xf32> -> vector<2x4xf32>
    %c0_i32 = arith.constant 0 : i32
    %9 = arith.cmpi eq, %arg1, %c0_i32 : i32
    %10 = arith.extui %9 : i1 to i32
    %c0_i32_4 = arith.constant 0 : i32
    %11 = arith.cmpi ne, %10, %c0_i32_4 : i32
    scf.if %11 {
      %c0_7 = arith.constant 0 : index
      %c0_8 = arith.constant 0 : index
      %c0_9 = arith.constant 0 : index
      %15 = vector.load %arg3[%c0_7, %c0_8, %c0_9] : memref<1x2x4xf32, #tpu.memory_space<vmem>>, vector<1x2x4xf32>
      %16 = vector.shape_cast %15 : vector<1x2x4xf32> to vector<2x4xf32>
      %17 = vector.shape_cast %8 : vector<2x4xf32> to vector<1x2x4xf32>
      tpu.vector_store %arg3[%c0_7, %c0_8, %c0_9], %17 {strides = array<i32>} : memref<1x2x4xf32, #tpu.memory_space<vmem>>, vector<1x2x4xf32>,
    } else {
    }
    %c0_i32_5 = arith.constant 0 : i32
    %12 = arith.cmpi ne, %arg1, %c0_i32_5 : i32
    %13 = arith.extui %12 : i1 to i32
    %c0_i32_6 = arith.constant 0 : i32
    %14 = arith.cmpi ne, %13, %c0_i32_6 : i32
    scf.if %14 {
      %c0_7 = arith.constant 0 : index
      %c0_8 = arith.constant 0 : index
      %c0_9 = arith.constant 0 : index
      %15 = vector.load %arg3[%c0_7, %c0_8, %c0_9] : memref<1x2x4xf32, #tpu.memory_space<vmem>>, vector<1x2x4xf32>
      %16 = vector.shape_cast %15 : vector<1x2x4xf32> to vector<2x4xf32>
      %17 = arith.addf %16, %8 : vector<2x4xf32>
      %c0_10 = arith.constant 0 : index
      %c0_11 = arith.constant 0 : index
      %c0_12 = arith.constant 0 : index
      %18 = vector.load %arg3[%c0_10, %c0_11, %c0_12] : memref<1x2x4xf32, #tpu.memory_space<vmem>>, vector<1x2x4xf32>
      %19 = vector.shape_cast %18 : vector<1x2x4xf32> to vector<2x4xf32>
      %20 = vector.shape_cast %17 : vector<2x4xf32> to vector<1x2x4xf32>
      tpu.vector_store %arg3[%c0_10, %c0_11, %c0_12], %20 {strides = array<i32>} : memref<1x2x4xf32, #tpu.memory_space<vmem>>, vector<1x2x4xf32>,
    } else {
    }
    return
  }
  func.func @transform_0(%arg0: i32, %arg1: i32) -> (i32, i32, i32, i32) {
    %c0_i32 = arith.constant 0 : i32
    %c0_i32_0 = arith.constant 0 : i32
    %c0_i32_1 = arith.constant 0 : i32
    return %arg0, %arg1, %c0_i32, %c0_i32_0 : i32, i32, i32, i32
  }
  func.func @transform_1(%arg0: i32, %arg1: i32) -> (i32, i32, i32) {
    %c0_i32 = arith.constant 0 : i32
    %c0_i32_0 = arith.constant 0 : i32
    %c0_i32_1 = arith.constant 0 : i32
    return %arg0, %c0_i32, %c0_i32_0 : i32, i32, i32
  }
}

</mosaic_0001>

<llo_original>
// kernel: tpu_custom_call.1
$region0: #{tpu_custom_call.1}
  #allocation0 [shape = 'u32[]', space=smem, size = 0x4, offset = 0x4, fixed_abs, tag = 'smem constant byte address 0x4 - core index']
  #allocation1 [shape = 'u32[144,128]{1,0:T(1,128)}', space=vmem, size = 0x12000, scoped, tag = 'internal scratch']
  %s0 = inlined_call_operand.vmem [shape: f32[2,16,16,4], index: 0, kind: input, shape index: {}]
  %s1 = inlined_call_operand.hbm [shape: f32[2,2,4], index: 1, kind: output, shape index: {}]
  %s2 = sld [smem:[#allocation0]]
  $region45: #{tpu_custom_call.1} parent=0
    _
  %s4 = ssub.s32 1, %s2
  %s5 = scalar_select 0, %s4, %s2
  $region1: #{tpu_custom_call.1} parent=0
    #allocation2 [shape = 'u8[2048]{0}', space=vmem, size = 0x800, scoped, tag = 'output window, operand 0']
    #allocation3 [shape = 's32[2]{0}', space=sflag, size = 0x8, scoped, tag = 'scoped memory for tpu_custom_call.1']
    %6 = vsyncpa [#allocation3], 0
    %s7 = scalar_lea.sflag [#allocation3], 1
    %8 = vsyncpa %s7, 0
    loop: start=0, step=1, limit=6
    $region2: #{tpu_custom_call.1} parent=1 // loop_pre_header
      _
    $region3: #{tpu_custom_call.1} parent=1 // loop_header
      %s10 = sphi 0, %s14
      %p11 = scmp.ge.s32.totalorder %s10, 6
      %s17 = sphi 0, %s29
      %s18 = sphi 0, %s25
      %s19 = sphi 0, %s17
      %s20 = sphi 0, %s18
      %s21 = sphi 0, %s19
      %s22 = sphi 0, %s20
      %s34 = sphi 0, %s36
      %s37 = sphi 0, %s34
      %s38 = sphi 0, %s37
      %s54 = sphi 0, %s38
      %s60 = sphi 0, %s62
      %s63 = sphi 0, %s60
      %s64 = sphi 0, %s63
      %s80 = sphi 0, %s64
    $region4: #{tpu_custom_call.1} parent=1 // loop_header_branch
      %13 = sbr.rel (%p11) target = $region8
    $region5: #{tpu_custom_call.1} parent=1 // loop_body
      %s15 = ssub.s32 %s10, 1
      %s16 = ssub.s32 %s10, 2
      %s23 = sadd.s32 1, %s18
      %p24 = scmp.ge.s32.totalorder %s23, 2
      %s25 = scalar_select %p24, 0, %s23
      %s26 = sadd.s32 1, %s17
      %s27 = scalar_select %p24, %s26, %s17
      %p28 = scmp.ge.s32.totalorder %s27, 2
      %s29 = scalar_select %p28, 0, %s27
      %s30 = ssub.s32 %s17, %s29
      %s31 = ssub.s32 %s18, %s25
      %s32 = sor.u32 %s30, %s31
      %p33 = scmp.eq.s32.totalorder %s32, 0
      %s35 = sadd.s32 %s34, 1
      %s36 = scalar_select %p33, %s34, %s35
      %p39 = pneg %p33
      %p40 = scmp.eq.s32.totalorder %s10, 3
      %p41 = por %p39, %p40
      %p42 = scmp.ne.s32.totalorder %s34, %s37
      %p43 = scmp.eq.s32.totalorder %s10, 0
      %p44 = por %p42, %p43
      %p45 = scmp.ne.s32.totalorder %s34, %s37
      %p46 = scmp.eq.s32.totalorder %s15, 3
      %p47 = por %p45, %p46
      %p48 = scmp.ne.s32.totalorder %s37, %s38
      %p49 = scmp.eq.s32.totalorder %s15, 0
      %p50 = por %p48, %p49
      %p51 = scmp.ne.s32.totalorder %s37, %s38
      %p52 = scmp.eq.s32.totalorder %s16, 3
      %p53 = por %p51, %p52
      %p55 = scmp.ne.s32.totalorder %s38, %s54
      %p56 = scmp.eq.s32.totalorder %s16, 0
      %p57 = por %p55, %p56
      %s58 = ssub.s32 %s17, %s29
      %p59 = scmp.eq.s32.totalorder %s58, 0
      %s61 = sadd.s32 %s60, 1
      %s62 = scalar_select %p59, %s60, %s61
      %p65 = pneg %p59
      %p66 = scmp.eq.s32.totalorder %s10, 3
      %p67 = por %p65, %p66
      %p68 = scmp.ne.s32.totalorder %s60, %s63
      %p69 = scmp.eq.s32.totalorder %s10, 0
      %p70 = por %p68, %p69
      %p71 = scmp.ne.s32.totalorder %s60, %s63
      %p72 = scmp.eq.s32.totalorder %s15, 3
      %p73 = por %p71, %p72
      %p74 = scmp.ne.s32.totalorder %s63, %s64
      %p75 = scmp.eq.s32.totalorder %s15, 0
      %p76 = por %p74, %p75
      %p77 = scmp.ne.s32.totalorder %s63, %s64
      %p78 = scmp.eq.s32.totalorder %s16, 3
      %p79 = por %p77, %p78
      %p81 = scmp.ne.s32.totalorder %s64, %s80
      %p82 = scmp.eq.s32.totalorder %s16, 0
      %p83 = por %p81, %p82
      %p84 = scmp.le.s32.totalorder 1, %s10
      %p85 = scmp.lt.s32.totalorder %s10, 5
      %p86 = pnand %p84, %p85
      %p87 = pneg %p86
      // Predicated region
      $region9: #{tpu_custom_call.1} parent=5 // pred_check
        _
      $region10: #{tpu_custom_call.1} parent=5 // pred_check_branch
        %89 = sbr.rel (%p86) target = $region12
      $region11: #{tpu_custom_call.1} parent=5 // pred_region
        %s90 = ssub.s32 %s10, 1
      $region12: #{tpu_custom_call.1} parent=5 // pred_fallthru
        _
      %p91 = scmp.lt.s32.totalorder %s10, 4
      // Predicated region
      $region13: #{tpu_custom_call.1} parent=5 // pred_check
        %p92 = pneg %p91
      $region14: #{tpu_custom_call.1} parent=5 // pred_check_branch
        %94 = sbr.rel (%p92) target = $region16
      $region15: #{tpu_custom_call.1} parent=5 // pred_region
        // Predicated region
        $region17: #{tpu_custom_call.1} parent=15 // pred_check
          %p95 = pneg %p44
        $region18: #{tpu_custom_call.1} parent=15 // pred_check_branch
          %97 = sbr.rel (%p95) target = $region20
        $region19: #{tpu_custom_call.1} parent=15 // pred_region
          %s98 = smul.u32 8, %s18
          %p99 = scmp.lt.s32.totalorder %s17, 1
          %s100 = scalar_select %p99, %s17, 1
          %p101 = scmp.lt.s32.totalorder %s98, 15
          %s102 = scalar_select %p101, %s98, 15
          %s103 = smul.addr %s102, 2
          %s104 = smul.addr %s100, 32
          %s105 = sadd.s32 %s103, %s104
          %s106 = smul.addr %s105, 8
          %s107 = scalar_lea.vmem %s0, %s106
          %s108 = smul.u32 8, %s18
        $region20: #{tpu_custom_call.1} parent=15 // pred_fallthru
          _
      $region16: #{tpu_custom_call.1} parent=5 // pred_fallthru
        _
      %p109 = scmp.le.s32.totalorder 1, %s10
      %p110 = scmp.lt.s32.totalorder %s10, 5
      %p111 = pnand %p109, %p110
      %p112 = pneg %p111
      // Predicated region
      $region21: #{tpu_custom_call.1} parent=5 // pred_check
        _
      $region22: #{tpu_custom_call.1} parent=5 // pred_check_branch
        %114 = sbr.rel (%p111) target = $region24
      $region23: #{tpu_custom_call.1} parent=5 // pred_region
        %s115 = ssub.s32 %s10, 1
        %s116 = smul.u32 8, %s20
        %p117 = scmp.lt.s32.totalorder %s19, 1
        %s118 = scalar_select %p117, %s19, 1
        %p119 = scmp.lt.s32.totalorder %s116, 15
        %s120 = scalar_select %p119, %s116, 15
        %s121 = smul.addr %s120, 2
        %s122 = smul.addr %s118, 32
        %s123 = sadd.s32 %s121, %s122
        %s124 = smul.addr %s123, 8
        %s125 = scalar_lea.vmem %s0, %s124
        %p126 = pneg %p50
        %p127 = pneg %p47
        %p128 = pneg %p76
        %p129 = pneg %p73
        %s130 = sand.u32 %s63, 1
        %s131 = scalar_lea.sflag [#allocation3], %s130
        %s132 = sand.u32 %s63, 1
        %s133 = smul.addr %s132, 2
        %s134 = scalar_lea.vmem [#allocation2], %s133
        %s135 = smul.u32 8, %s20
        %p136 = scmp.lt.s32.totalorder %s19, 1
        %s137 = scalar_select %p136, %s19, 1
        %p138 = scmp.lt.s32.totalorder %s135, 15
        %s139 = scalar_select %p138, %s135, 15
        %s140 = smul.addr %s139, 2
        %s141 = smul.addr %s137, 32
        %s142 = sadd.s32 %s140, %s141
        %s143 = smul.addr %s142, 8
        %s144 = scalar_lea.vmem %s0, %s143
        %s145 = smul.u32 8, %s20
        %v146 = vld [vmem:[%s144] sm:$0xff]
        %v147 = vld [vmem:[%s144 + $0x8] sm:$0xff]
        %v148 = vld [vmem:[%s144 + $0x10] sm:$0xff]
        %v149 = vld [vmem:[%s144 + $0x18] sm:$0xff]
        %v150 = vld [vmem:[%s144 + $0x20] sm:$0xff]
        %v151 = vld [vmem:[%s144 + $0x28] sm:$0xff]
        %v152 = vld [vmem:[%s144 + $0x30] sm:$0xff]
        %v153 = vld [vmem:[%s144 + $0x38] sm:$0xff]
        %v154 = vld [vmem:[%s144 + $0x40] sm:$0xff]
        %v155 = vld [vmem:[%s144 + $0x48] sm:$0xff]
        %v156 = vld [vmem:[%s144 + $0x50] sm:$0xff]
        %v157 = vld [vmem:[%s144 + $0x58] sm:$0xff]
        %v158 = vld [vmem:[%s144 + $0x60] sm:$0xff]
        %v159 = vld [vmem:[%s144 + $0x68] sm:$0xff]
        %v160 = vld [vmem:[%s144 + $0x70] sm:$0xff]
        %v161 = vld [vmem:[%s144 + $0x78] sm:$0xff]
        %vm162 = vcmask 31744
        %v163 = vsel %vm162, %v146, 0.0
        %v164 = vsel %vm162, %v147, 0.0
        %v165 = vadd.f32 %v163, %v164
        %v166 = vsel %vm162, %v148, 0.0
        %v167 = vadd.f32 %v165, %v166
        %v168 = vsel %vm162, %v149, 0.0
        %v169 = vadd.f32 %v167, %v168
        %v170 = vsel %vm162, %v150, 0.0
        %v171 = vadd.f32 %v169, %v170
        %v172 = vsel %vm162, %v151, 0.0
        %v173 = vadd.f32 %v171, %v172
        %v174 = vsel %vm162, %v152, 0.0
        %v175 = vadd.f32 %v173, %v174
        %v176 = vsel %vm162, %v153, 0.0
        %v177 = vadd.f32 %v175, %v176
        %v178 = vsel %vm162, %v154, 0.0
        %v179 = vadd.f32 %v177, %v178
        %v180 = vsel %vm162, %v155, 0.0
        %v181 = vadd.f32 %v179, %v180
        %v182 = vsel %vm162, %v156, 0.0
        %v183 = vadd.f32 %v181, %v182
        %v184 = vsel %vm162, %v157, 0.0
        %v185 = vadd.f32 %v183, %v184
        %v186 = vsel %vm162, %v158, 0.0
        %v187 = vadd.f32 %v185, %v186
        %v188 = vsel %vm162, %v159, 0.0
        %v189 = vadd.f32 %v187, %v188
        %v190 = vsel %vm162, %v160, 0.0
        %v191 = vadd.f32 %v189, %v190
        %v192 = vsel %vm162, %v161, 0.0
        %v193 = vadd.f32 %v191, %v192
        %v194 = vrot.slane %v193, 4
        %v195 = vadd.f32 %v193, %v194
        %v196 = vrot.slane %v195, 2
        %v197 = vadd.f32 %v195, %v196
        %v198 = vrot.slane %v197, 1
        %v199 = vadd.f32 %v197, %v198
        %v200 = vmul.f32 %v146, %v146
        %v201 = vmul.f32 %v147, %v147
        %v202 = vmul.f32 %v148, %v148
        %v203 = vmul.f32 %v149, %v149
        %v204 = vmul.f32 %v150, %v150
        %v205 = vmul.f32 %v151, %v151
        %v206 = vmul.f32 %v152, %v152
        %v207 = vmul.f32 %v153, %v153
        %v208 = vmul.f32 %v154, %v154
        %v209 = vmul.f32 %v155, %v155
        %v210 = vmul.f32 %v156, %v156
        %v211 = vmul.f32 %v157, %v157
        %v212 = vmul.f32 %v158, %v158
        %v213 = vmul.f32 %v159, %v159
        %v214 = vmul.f32 %v160, %v160
        %v215 = vmul.f32 %v161, %v161
        %v216 = vsel %vm162, %v200, 0.0
        %v217 = vsel %vm162, %v201, 0.0
        %v218 = vadd.f32 %v216, %v217
        %v219 = vsel %vm162, %v202, 0.0
        %v220 = vadd.f32 %v218, %v219
        %v221 = vsel %vm162, %v203, 0.0
        %v222 = vadd.f32 %v220, %v221
        %v223 = vsel %vm162, %v204, 0.0
        %v224 = vadd.f32 %v222, %v223
        %v225 = vsel %vm162, %v205, 0.0
        %v226 = vadd.f32 %v224, %v225
        %v227 = vsel %vm162, %v206, 0.0
        %v228 = vadd.f32 %v226, %v227
        %v229 = vsel %vm162, %v207, 0.0
        %v230 = vadd.f32 %v228, %v229
        %v231 = vsel %vm162, %v208, 0.0
        %v232 = vadd.f32 %v230, %v231
        %v233 = vsel %vm162, %v209, 0.0
        %v234 = vadd.f32 %v232, %v233
        %v235 = vsel %vm162, %v210, 0.0
        %v236 = vadd.f32 %v234, %v235
        %v237 = vsel %vm162, %v211, 0.0
        %v238 = vadd.f32 %v236, %v237
        %v239 = vsel %vm162, %v212, 0.0
        %v240 = vadd.f32 %v238, %v239
        %v241 = vsel %vm162, %v213, 0.0
        %v242 = vadd.f32 %v240, %v241
        %v243 = vsel %vm162, %v214, 0.0
        %v244 = vadd.f32 %v242, %v243
        %v245 = vsel %vm162, %v215, 0.0
        %v246 = vadd.f32 %v244, %v245
        %v247 = vrot.slane %v246, 4
        %v248 = vadd.f32 %v246, %v247
        %v249 = vrot.slane %v248, 2
        %v250 = vadd.f32 %v248, %v249
        %v251 = vrot.slane %v250, 1
        %v252 = vadd.f32 %v250, %v251
        %vm253 = vcmask 1040384
        %v254 = vsel %vm253, %v199, %v252
        %p255 = scmp.eq.s32.totalorder %s20, 0
        // Predicated region
        $region25: #{tpu_custom_call.1} parent=23 // pred_check
          %p256 = pneg %p255
        $region26: #{tpu_custom_call.1} parent=23 // pred_check_branch
          %258 = sbr.rel (%p256) target = $region28
        $region27: #{tpu_custom_call.1} parent=23 // pred_region
          %vm259 = vcmask 25600
          %260 = vst.msk [vmem:[%s134] sm:$0x3] %vm259, %v254
        $region28: #{tpu_custom_call.1} parent=23 // pred_fallthru
          _
        %p261 = scmp.ne.s32.totalorder %s20, 0
        // Predicated region
        $region29: #{tpu_custom_call.1} parent=23 // pred_check
          %p262 = pneg %p261
        $region30: #{tpu_custom_call.1} parent=23 // pred_check_branch
          %264 = sbr.rel (%p262) target = $region32
        $region31: #{tpu_custom_call.1} parent=23 // pred_region
          %v265 = vld [vmem:[%s134] sm:$0x3]
          %v266 = vadd.f32 %v265, %v254
          %vm267 = vcmask 25600
          %268 = vst.msk [vmem:[%s134] sm:$0x3] %vm267, %v266
        $region32: #{tpu_custom_call.1} parent=23 // pred_fallthru
          _
        %s269 = sand.u32 %s63, 1
        %s270 = scalar_lea.sflag [#allocation3], %s269
        %s271 = sand.u32 %s63, 1
        %s272 = smul.addr %s271, 2
        %s273 = scalar_lea.vmem [#allocation2], %s272
        // Predicated region
        $region33: #{tpu_custom_call.1} parent=23 // pred_check
          %p274 = pneg %p73
        $region34: #{tpu_custom_call.1} parent=23 // pred_check_branch
          %276 = sbr.rel (%p274) target = $region36
        $region35: #{tpu_custom_call.1} parent=23 // pred_region
          %s278 = ssub.s32 32, 32
          %279 = vsyncadd %s270, %s278
          %s280 = smul.addr %s19, 32
          %s281 = scalar_lea.hbm %s1, %s280
          %s283 = sshll.u32 %s273, 4
          %s284 = int_to_ptr.vmem [resolvable:$true] %s283
          %286 = dma.vmem_to_hbm [thread:$0]  %s284, 32, %s281, %s270
        $region36: #{tpu_custom_call.1} parent=23 // pred_fallthru
          _
      $region24: #{tpu_custom_call.1} parent=5 // pred_fallthru
        _
      %p287 = scmp.le.s32.totalorder 2, %s10
      // Predicated region
      $region37: #{tpu_custom_call.1} parent=5 // pred_check
        %p288 = pneg %p287
      $region38: #{tpu_custom_call.1} parent=5 // pred_check_branch
        %290 = sbr.rel (%p288) target = $region40
      $region39: #{tpu_custom_call.1} parent=5 // pred_region
        %s291 = ssub.s32 %s10, 2
        // Predicated region
        $region41: #{tpu_custom_call.1} parent=39 // pred_check
          %p292 = pneg %p79
        $region42: #{tpu_custom_call.1} parent=39 // pred_check_branch
          %294 = sbr.rel (%p292) target = $region44
        $region43: #{tpu_custom_call.1} parent=39 // pred_region
          %s295 = sand.u32 %s64, 1
          %s296 = scalar_lea.sflag [#allocation3], %s295
          %s297 = sand.u32 %s64, 1
          %s298 = smul.addr %s297, 2
          %s299 = scalar_lea.vmem [#allocation2], %s298
          %300 = dma.done %s296, 32
        $region44: #{tpu_custom_call.1} parent=39 // pred_fallthru
          _
      $region40: #{tpu_custom_call.1} parent=5 // pred_fallthru
        _
    $region6: #{tpu_custom_call.1} parent=1 // loop_footer
      %s14 = sadd.s32 1, %s10
    $region7: #{tpu_custom_call.1} parent=1 // loop_footer_branch
      %9 = sbr.rel target = $region3
    $region8: #{tpu_custom_call.1} parent=1 // loop_exit
      _
    %301 = vsyncpa [#allocation3], 1
    %s302 = scalar_lea.sflag [#allocation3], 1
    %303 = vsyncpa %s302, 1

</llo_original>
